<compile_context>
chip_gen: v7x
topology: tpu7x:2x2x1
jax: 0.10.0
libtpu: 0.0.40
codegen_flags: <defaults>
</compile_context>

<pallas_src>
import jax
import jax.numpy as jnp
from jax.experimental import pallas as pl
from jax.experimental.pallas import tpu as pltpu


# ----------------------------- kernels ------------------------------------

def _gated_skip_proj_kernel(x_ref, xnew_ref,
                            wfc_ref, bfc_ref,
                            w1f_ref, b1f_ref,
                            w2_ref, b2_ref,
                            o_ref):
    """input_dim != output_dim path.

    fc_1 has been folded into the gate path in the wrapper:
        w1f = wfc @ w1,  b1f = bfc @ w1 + b1
    so the three matmuls below have no data dependence on each other.
    """
    x = x_ref[...]          # native dtype straight to the MXU
    x_new = xnew_ref[...]

    xp = jnp.dot(x, wfc_ref[...], preferred_element_type=jnp.float32) + bfc_ref[...]
    g1 = jnp.dot(x, w1f_ref[...], preferred_element_type=jnp.float32) + b1f_ref[...]
    g2 = jnp.dot(x_new, w2_ref[...], preferred_element_type=jnp.float32) + b2_ref[...]
    gate = jax.nn.sigmoid(g1 + g2)

    xn = x_new.astype(jnp.float32)
    # out = x_new*gate + xp*(1-gate)  ==  xp + gate*(x_new - xp)
    o_ref[...] = (xp + gate * (xn - xp)).astype(o_ref.dtype)


def _gated_skip_noproj_kernel(x_ref, xnew_ref,
                              w1_ref, b1_ref,
                              w2_ref, b2_ref,
                              o_ref):
    """input_dim == output_dim path (no fc_1)."""
    x = x_ref[...]
    x_new = xnew_ref[...]

    g1 = jnp.dot(x, w1_ref[...], preferred_element_type=jnp.float32) + b1_ref[...]
    g2 = jnp.dot(x_new, w2_ref[...], preferred_element_type=jnp.float32) + b2_ref[...]
    gate = jax.nn.sigmoid(g1 + g2)

    xf = x.astype(jnp.float32)
    xn = x_new.astype(jnp.float32)
    o_ref[...] = (xf + gate * (xn - xf)).astype(o_ref.dtype)


# ----------------------------- wrapper -------------------------------------

_TILE_BUDGET_BYTES = 32 << 20   # budget for the double-buffered row blocks
_VMEM_LIMIT_BYTES = 48 << 20    # scoped limit; leaves headroom under v7x's 64 MiB


def _pick_batch_tile(B, input_dim, output_dim, itemsize):
    """Largest batch tile (multiple of 8, <= 1024) whose double-buffered
    x / x_new / out row blocks fit the VMEM budget."""
    bytes_per_row = (input_dim + 2 * output_dim) * itemsize * 2  # 2x double-buffered
    tm = _TILE_BUDGET_BYTES // max(bytes_per_row, 1)
    tm = max(8, min(1024, (tm // 8) * 8))
    if B <= tm:
        return B           # full-extent block is always a legal block shape
    return tm


def gated_skip_connection(x, x_new, params):
    """params (pre-transposed to [in, out]; biases as [1, out]):
         w1, b1, w2, b2, and wfc, bfc when input_dim != output_dim."""
    B, input_dim = x.shape
    B2, output_dim = x_new.shape
    assert B == B2
    out_dtype = x_new.dtype

    itemsize = max(jnp.dtype(x.dtype).itemsize, jnp.dtype(out_dtype).itemsize)
    tm = _pick_batch_tile(B, input_dim, output_dim, itemsize)
    grid = (pl.cdiv(B, tm),)

    # Row blocks walk the batch axis; weights/biases keep a constant block
    # index so they stay resident in VMEM across grid steps.
    def row_spec(ncols):
        return pl.BlockSpec((tm, ncols), lambda i: (i, 0))

    def const_spec(shape):
        return pl.BlockSpec(shape, lambda i: (0, 0))

    if input_dim != output_dim:
        # Fold fc_1 into gated_X1:  gated_X1(fc_1(x)) = x @ (wfc@w1) + (bfc@w1 + b1)
        wfc32 = params["wfc"].astype(jnp.float32)
        bfc32 = params["bfc"].astype(jnp.float32)
        w1_32 = params["w1"].astype(jnp.float32)
        w1f = wfc32 @ w1_32
        b1f = bfc32 @ w1_32 + params["b1"].astype(jnp.float32)
        args = (x, x_new, params["wfc"], params["bfc"], w1f, b1f,
                params["w2"], params["b2"])
        kernel = _gated_skip_proj_kernel
    else:
        args = (x, x_new, params["w1"], params["b1"],
                params["w2"], params["b2"])
        kernel = _gated_skip_noproj_kernel

    in_specs = [row_spec(input_dim), row_spec(output_dim)]
    in_specs += [const_spec(a.shape) for a in args[2:]]

    return pl.pallas_call(
        kernel,
        out_shape=jax.ShapeDtypeStruct((B, output_dim), out_dtype),
        grid=grid,
        in_specs=in_specs,
        out_specs=row_spec(output_dim),
        compiler_params=pltpu.CompilerParams(
            dimension_semantics=("parallel",),   # shard batch tiles over TCs (v7x)
            vmem_limit_bytes=_VMEM_LIMIT_BYTES),
    )(*args)


# ----------------------------- reference -----------------------------------

def gated_skip_reference(x, x_new, params, input_dim, output_dim):
    xf = x.astype(jnp.float32)
    xn = x_new.astype(jnp.float32)
    if input_dim != output_dim:
        xf = xf @ params["wfc"] + params["bfc"]
    gate = jax.nn.sigmoid(xf @ params["w1"] + params["b1"]
                          + xn @ params["w2"] + params["b2"])
    return (xn * gate + xf * (1.0 - gate)).astype(x_new.dtype)


# ----------------------------- main -----------------------------------------

if __name__ == "__main__":
    key = jax.random.PRNGKey(0)

    def linear_init(kw, kb, fan_in, fan_out):
        # PyTorch nn.Linear default: U(-1/sqrt(fan_in), 1/sqrt(fan_in)).
        bound = 1.0 / jnp.sqrt(float(fan_in))
        w = jax.random.uniform(kw, (fan_in, fan_out), jnp.float32, -bound, bound)
        b = jax.random.uniform(kb, (1, fan_out), jnp.float32, -bound, bound)
        return w, b

    # --- case 1: input_dim != output_dim (fc_1 projection path) -------------
    B, input_dim, output_dim = 8, 16, 32
    keys = jax.random.split(key, 9)
    x = jax.random.normal(keys[0], (B, input_dim), jnp.float32)
    x_new = jax.random.normal(keys[1], (B, output_dim), jnp.float32)
    wfc, bfc = linear_init(keys[2], keys[3], input_dim, output_dim)   # fc_1
    w1, b1 = linear_init(keys[4], keys[5], output_dim, output_dim)    # gated_X1
    w2, b2 = linear_init(keys[6], keys[7], output_dim, output_dim)    # gated_X2
    params = {"wfc": wfc, "bfc": bfc, "w1": w1, "b1": b1, "w2": w2, "b2": b2}

    out = jax.block_until_ready(gated_skip_connection(x, x_new, params))
    ref = gated_skip_reference(x, x_new, params, input_dim, output_dim)
    assert out.shape == (B, output_dim), out.shape
    assert jnp.allclose(out, ref, atol=1e-4, rtol=1e-4), \
        float(jnp.max(jnp.abs(out - ref)))

    # --- case 2: input_dim == output_dim (no projection path) ---------------
    B2, dim = 64, 32
    keys2 = jax.random.split(keys[8], 6)
    x2 = jax.random.normal(keys2[0], (B2, dim), jnp.float32)
    x2_new = jax.random.normal(keys2[1], (B2, dim), jnp.float32)
    w1b, b1b = linear_init(keys2[2], keys2[3], dim, dim)
    w2b, b2b = linear_init(keys2[4], keys2[5], dim, dim)
    params2 = {"w1": w1b, "b1": b1b, "w2": w2b, "b2": b2b}

    out2 = jax.block_until_ready(gated_skip_connection(x2, x2_new, params2))
    ref2 = gated_skip_reference(x2, x2_new, params2, dim, dim)
    assert out2.shape == (B2, dim), out2.shape
    assert jnp.allclose(out2, ref2, atol=1e-4, rtol=1e-4), \
        float(jnp.max(jnp.abs(out2 - ref2)))

    print("KERNEL_OK")
</pallas_src>

<mosaic_0001>
module attributes {stable_mosaic.version = 11 : i64} {
  func.func @_gated_skip_proj_kernel(%arg0: i32, %arg1: memref<8x16xf32, #tpu.memory_space<vmem>>, %arg2: memref<8x32xf32, #tpu.memory_space<vmem>>, %arg3: memref<16x32xf32, #tpu.memory_space<vmem>>, %arg4: memref<1x32xf32, #tpu.memory_space<vmem>>, %arg5: memref<16x32xf32, #tpu.memory_space<vmem>>, %arg6: memref<1x32xf32, #tpu.memory_space<vmem>>, %arg7: memref<32x32xf32, #tpu.memory_space<vmem>>, %arg8: memref<1x32xf32, #tpu.memory_space<vmem>>, %arg9: memref<8x32xf32, #tpu.memory_space<vmem>>) attributes {dimension_semantics = [#tpu.dimension_semantics<parallel>], iteration_bounds = array<i64: 1>, scalar_prefetch = 0 : i64, scratch_operands = 0 : i64, tpu.core_type = #tpu.core_type<tc>, window_params = [{transform_indices = @transform_0, window_bounds = array<i64: 8, 16>}, {transform_indices = @transform_1, window_bounds = array<i64: 8, 32>}, {pipeline_mode = #tpu.pipeline_mode<synchronous>, transform_indices = @transform_2, window_bounds = array<i64: 16, 32>}, {pipeline_mode = #tpu.pipeline_mode<synchronous>, transform_indices = @transform_3, window_bounds = array<i64: 1, 32>}, {pipeline_mode = #tpu.pipeline_mode<synchronous>, transform_indices = @transform_4, window_bounds = array<i64: 16, 32>}, {pipeline_mode = #tpu.pipeline_mode<synchronous>, transform_indices = @transform_5, window_bounds = array<i64: 1, 32>}, {pipeline_mode = #tpu.pipeline_mode<synchronous>, transform_indices = @transform_6, window_bounds = array<i64: 32, 32>}, {pipeline_mode = #tpu.pipeline_mode<synchronous>, transform_indices = @transform_7, window_bounds = array<i64: 1, 32>}, {transform_indices = @transform_8, window_bounds = array<i64: 8, 32>}]} {
    %c0 = arith.constant 0 : index
    %c0_0 = arith.constant 0 : index
    %0 = vector.load %arg1[%c0, %c0_0] : memref<8x16xf32, #tpu.memory_space<vmem>>, vector<8x16xf32>
    %c0_1 = arith.constant 0 : index
    %c0_2 = arith.constant 0 : index
    %1 = vector.load %arg2[%c0_1, %c0_2] : memref<8x32xf32, #tpu.memory_space<vmem>>, vector<8x32xf32>
    %c0_3 = arith.constant 0 : index
    %c0_4 = arith.constant 0 : index
    %2 = vector.load %arg3[%c0_3, %c0_4] : memref<16x32xf32, #tpu.memory_space<vmem>>, vector<16x32xf32>
    %cst = arith.constant dense<0.000000e+00> : vector<8x32xf32>
    %3 = tpu.matmul %0, %2, %cst {dimension_numbers = #tpu.dot_dimension_numbers<[1], [0], [0], [1], [0, 0, 1, 1], [], []>} : vector<8x16xf32>, vector<16x32xf32>, vector<8x32xf32> -> vector<8x32xf32>
    %c0_5 = arith.constant 0 : index
    %c0_6 = arith.constant 0 : index
    %4 = vector.load %arg4[%c0_5, %c0_6] : memref<1x32xf32, #tpu.memory_space<vmem>>, vector<1x32xf32>
    %5 = vector.broadcast %4 : vector<1x32xf32> to vector<8x32xf32>
    %6 = arith.addf %3, %5 : vector<8x32xf32>
    %c0_7 = arith.constant 0 : index
    %c0_8 = arith.constant 0 : index
    %7 = vector.load %arg5[%c0_7, %c0_8] : memref<16x32xf32, #tpu.memory_space<vmem>>, vector<16x32xf32>
    %cst_9 = arith.constant dense<0.000000e+00> : vector<8x32xf32>
    %8 = tpu.matmul %0, %7, %cst_9 {dimension_numbers = #tpu.dot_dimension_numbers<[1], [0], [0], [1], [0, 0, 1, 1], [], []>} : vector<8x16xf32>, vector<16x32xf32>, vector<8x32xf32> -> vector<8x32xf32>
    %c0_10 = arith.constant 0 : index
    %c0_11 = arith.constant 0 : index
    %9 = vector.load %arg6[%c0_10, %c0_11] : memref<1x32xf32, #tpu.memory_space<vmem>>, vector<1x32xf32>
    %10 = vector.broadcast %9 : vector<1x32xf32> to vector<8x32xf32>
    %11 = arith.addf %8, %10 : vector<8x32xf32>
    %c0_12 = arith.constant 0 : index
    %c0_13 = arith.constant 0 : index
    %12 = vector.load %arg7[%c0_12, %c0_13] : memref<32x32xf32, #tpu.memory_space<vmem>>, vector<32x32xf32>
    %cst_14 = arith.constant dense<0.000000e+00> : vector<8x32xf32>
    %13 = tpu.matmul %1, %12, %cst_14 {dimension_numbers = #tpu.dot_dimension_numbers<[1], [0], [0], [1], [0, 0, 1, 1], [], []>} : vector<8x32xf32>, vector<32x32xf32>, vector<8x32xf32> -> vector<8x32xf32>
    %c0_15 = arith.constant 0 : index
    %c0_16 = arith.constant 0 : index
    %14 = vector.load %arg8[%c0_15, %c0_16] : memref<1x32xf32, #tpu.memory_space<vmem>>, vector<1x32xf32>
    %15 = vector.broadcast %14 : vector<1x32xf32> to vector<8x32xf32>
    %16 = arith.addf %13, %15 : vector<8x32xf32>
    %17 = arith.addf %11, %16 : vector<8x32xf32>
    %18 = arith.negf %17 : vector<8x32xf32>
    %19 = math.exp %18 : vector<8x32xf32>
    %cst_17 = arith.constant 1.000000e+00 : f32
    %20 = vector.broadcast %cst_17 : f32 to vector<8x32xf32>
    %21 = arith.addf %20, %19 : vector<8x32xf32>
    %22 = arith.divf %20, %21 : vector<8x32xf32>
    %23 = arith.subf %1, %6 : vector<8x32xf32>
    %24 = arith.mulf %22, %23 : vector<8x32xf32>
    %25 = arith.addf %6, %24 : vector<8x32xf32>
    %c0_18 = arith.constant 0 : index
    %c0_19 = arith.constant 0 : index
    %26 = vector.load %arg9[%c0_18, %c0_19] : memref<8x32xf32, #tpu.memory_space<vmem>>, vector<8x32xf32>
    tpu.vector_store %arg9[%c0_18, %c0_19], %25 {strides = array<i32>} : memref<8x32xf32, #tpu.memory_space<vmem>>, vector<8x32xf32>,
    return
  }
  func.func @transform_0(%arg0: i32) -> (i32, i32) {
    %c0_i32 = arith.constant 0 : i32
    %c0_i32_0 = arith.constant 0 : i32
    return %arg0, %c0_i32 : i32, i32
  }
  func.func @transform_1(%arg0: i32) -> (i32, i32) {
    %c0_i32 = arith.constant 0 : i32
    %c0_i32_0 = arith.constant 0 : i32
    return %arg0, %c0_i32 : i32, i32
  }
  func.func @transform_2(%arg0: i32) -> (i32, i32) {
    %c0_i32 = arith.constant 0 : i32
    %c0_i32_0 = arith.constant 0 : i32
    %c0_i32_1 = arith.constant 0 : i32
    return %c0_i32, %c0_i32_0 : i32, i32
  }
  func.func @transform_3(%arg0: i32) -> (i32, i32) {
    %c0_i32 = arith.constant 0 : i32
    %c0_i32_0 = arith.constant 0 : i32
    %c0_i32_1 = arith.constant 0 : i32
    return %c0_i32, %c0_i32_0 : i32, i32
  }
  func.func @transform_4(%arg0: i32) -> (i32, i32) {
    %c0_i32 = arith.constant 0 : i32
    %c0_i32_0 = arith.constant 0 : i32
    %c0_i32_1 = arith.constant 0 : i32
    return %c0_i32, %c0_i32_0 : i32, i32
  }
  func.func @transform_5(%arg0: i32) -> (i32, i32) {
    %c0_i32 = arith.constant 0 : i32
    %c0_i32_0 = arith.constant 0 : i32
    %c0_i32_1 = arith.constant 0 : i32
    return %c0_i32, %c0_i32_0 : i32, i32
  }
  func.func @transform_6(%arg0: i32) -> (i32, i32) {
    %c0_i32 = arith.constant 0 : i32
    %c0_i32_0 = arith.constant 0 : i32
    %c0_i32_1 = arith.constant 0 : i32
    return %c0_i32, %c0_i32_0 : i32, i32
  }
  func.func @transform_7(%arg0: i32) -> (i32, i32) {
    %c0_i32 = arith.constant 0 : i32
    %c0_i32_0 = arith.constant 0 : i32
    %c0_i32_1 = arith.constant 0 : i32
    return %c0_i32, %c0_i32_0 : i32, i32
  }
  func.func @transform_8(%arg0: i32) -> (i32, i32) {
    %c0_i32 = arith.constant 0 : i32
    %c0_i32_0 = arith.constant 0 : i32
    return %arg0, %c0_i32 : i32, i32
  }
}

</mosaic_0001>

<llo_original>
// kernel: tpu_custom_call.1
$region0: #{tpu_custom_call.1}
  #allocation0 [shape = 'u32[]', space=smem, size = 0x4, offset = 0x4, fixed_abs, tag = 'smem constant byte address 0x4 - core index']
  #allocation1 [shape = 'u32[144,128]{1,0:T(1,128)}', space=vmem, size = 0x12000, scoped, tag = 'internal scratch']
  %s0 = inlined_call_operand.hbm [shape: f32[8,16], index: 0, kind: input, shape index: {}]
  %s1 = inlined_call_operand.hbm [shape: f32[8,32], index: 1, kind: input, shape index: {}]
  %s2 = inlined_call_operand.hbm [shape: f32[16,32], index: 2, kind: input, shape index: {}]
  %s3 = inlined_call_operand.vmem [shape: f32[1,32], index: 3, kind: input, shape index: {}]
  %s4 = inlined_call_operand.hbm [shape: f32[16,32], index: 4, kind: input, shape index: {}]
  %s5 = inlined_call_operand.vmem [shape: f32[1,32], index: 5, kind: input, shape index: {}]
  %s6 = inlined_call_operand.hbm [shape: f32[32,32], index: 6, kind: input, shape index: {}]
  %s7 = inlined_call_operand.vmem [shape: f32[1,32], index: 7, kind: input, shape index: {}]
  %s8 = inlined_call_operand.hbm [shape: f32[8,32], index: 8, kind: output, shape index: {}]
  %s9 = sld [smem:[#allocation0]]
  $region62: #{tpu_custom_call.1} parent=0
    _
  %s11 = ssub.s32 1, %s9
  %s12 = scalar_select 0, %s11, %s9
  $region1: #{tpu_custom_call.1} parent=0
    #allocation2 [shape = 'u8[4096]{0}', space=vmem, size = 0x1000, scoped, tag = 'input window, operand 0, single buffered']
    #allocation3 [shape = 's32[1]{0}', space=sflag, size = 0x4, scoped, tag = 'scoped memory for tpu_custom_call.1']
    #allocation4 [shape = 's32[1]{0}', space=sflag, size = 0x4, scoped, tag = 'scoped memory for tpu_custom_call.1']
    #allocation5 [shape = 'u8[4096]{0}', space=vmem, size = 0x1000, scoped, tag = 'input window, operand 1, single buffered']
    #allocation6 [shape = 's32[1]{0}', space=sflag, size = 0x4, scoped, tag = 'scoped memory for tpu_custom_call.1']
    #allocation7 [shape = 'u8[8192]{0}', space=vmem, size = 0x2000, scoped, tag = 'input window, operand 2, single buffered']
    #allocation8 [shape = 'u8[8192]{0}', space=vmem, size = 0x2000, scoped, tag = 'input window, operand 4, single buffered']
    #allocation9 [shape = 's32[1]{0}', space=sflag, size = 0x4, scoped, tag = 'scoped memory for tpu_custom_call.1']
    #allocation10 [shape = 'u8[16384]{0}', space=vmem, size = 0x4000, scoped, tag = 'input window, operand 6, single buffered']
    #allocation11 [shape = 'u8[4096]{0}', space=vmem, size = 0x1000, scoped, tag = 'output window, operand 0, single buffered']
    %13 = vsyncpa [#allocation3], 0
    %14 = vsyncpa [#allocation6], 0
    %15 = vsyncpa [#allocation9], 0
    %16 = vsyncpa [#allocation4], 0
    // Predicated region
    $region2: #{tpu_custom_call.1} parent=1 // pred_check
      _
    $region3: #{tpu_custom_call.1} parent=1 // pred_check_branch
      %18 = sbr.rel (0) target = $region5
    $region4: #{tpu_custom_call.1} parent=1 // pred_region
      %s20 = ssub.s32 128, 128
      %21 = vsyncadd [#allocation3], %s20
      %s23 = sshll.u32 [#allocation2], 4
      %s24 = int_to_ptr.vmem [resolvable:$true] %s23
      %26 = dma.hbm_to_vmem [thread:$0]  %s0, 128, %s24, [#allocation3]
    $region5: #{tpu_custom_call.1} parent=1 // pred_fallthru
      _
    // Predicated region
    $region6: #{tpu_custom_call.1} parent=1 // pred_check
      _
    $region7: #{tpu_custom_call.1} parent=1 // pred_check_branch
      %28 = sbr.rel (0) target = $region9
    $region8: #{tpu_custom_call.1} parent=1 // pred_region
      %s30 = ssub.s32 128, 128
      %31 = vsyncadd [#allocation6], %s30
      %s33 = sshll.u32 [#allocation5], 4
      %s34 = int_to_ptr.vmem [resolvable:$true] %s33
      %36 = dma.hbm_to_vmem [thread:$0]  %s1, 128, %s34, [#allocation6]
    $region9: #{tpu_custom_call.1} parent=1 // pred_fallthru
      _
    // Predicated region
    $region10: #{tpu_custom_call.1} parent=1 // pred_check
      _
    $region11: #{tpu_custom_call.1} parent=1 // pred_check_branch
      %38 = sbr.rel (0) target = $region13
    $region12: #{tpu_custom_call.1} parent=1 // pred_region
      %s40 = ssub.s32 256, 256
      %41 = vsyncadd [#allocation6], %s40
      %s42 = sshll.u32 [#allocation7], 4
      %s43 = int_to_ptr.vmem [resolvable:$true] %s42
      %48 = dma.hbm_to_vmem [thread:$0]  %s2, 256, %s43, [#allocation6], 128, 128, 8
    $region13: #{tpu_custom_call.1} parent=1 // pred_fallthru
      _
    // Predicated region
    $region14: #{tpu_custom_call.1} parent=1 // pred_check
      _
    $region15: #{tpu_custom_call.1} parent=1 // pred_check_branch
      %50 = sbr.rel (0) target = $region17
    $region16: #{tpu_custom_call.1} parent=1 // pred_region
      _
    $region17: #{tpu_custom_call.1} parent=1 // pred_fallthru
      _
    // Predicated region
    $region18: #{tpu_custom_call.1} parent=1 // pred_check
      _
    $region19: #{tpu_custom_call.1} parent=1 // pred_check_branch
      %52 = sbr.rel (0) target = $region21
    $region20: #{tpu_custom_call.1} parent=1 // pred_region
      %s54 = ssub.s32 256, 256
      %55 = vsyncadd [#allocation9], %s54
      %s56 = sshll.u32 [#allocation8], 4
      %s57 = int_to_ptr.vmem [resolvable:$true] %s56
      %62 = dma.hbm_to_vmem [thread:$0]  %s4, 256, %s57, [#allocation9], 128, 128, 8
    $region21: #{tpu_custom_call.1} parent=1 // pred_fallthru
      _
    // Predicated region
    $region22: #{tpu_custom_call.1} parent=1 // pred_check
      _
    $region23: #{tpu_custom_call.1} parent=1 // pred_check_branch
      %64 = sbr.rel (0) target = $region25
    $region24: #{tpu_custom_call.1} parent=1 // pred_region
      _
    $region25: #{tpu_custom_call.1} parent=1 // pred_fallthru
      _
    // Predicated region
    $region26: #{tpu_custom_call.1} parent=1 // pred_check
      _
    $region27: #{tpu_custom_call.1} parent=1 // pred_check_branch
      %66 = sbr.rel (0) target = $region29
    $region28: #{tpu_custom_call.1} parent=1 // pred_region
      %s68 = ssub.s32 512, 512
      %69 = vsyncadd [#allocation9], %s68
      %s70 = sshll.u32 [#allocation10], 4
      %s71 = int_to_ptr.vmem [resolvable:$true] %s70
      %76 = dma.hbm_to_vmem [thread:$0]  %s6, 512, %s71, [#allocation9], 128, 128, 8
    $region29: #{tpu_custom_call.1} parent=1 // pred_fallthru
      _
    // Predicated region
    $region30: #{tpu_custom_call.1} parent=1 // pred_check
      _
    $region31: #{tpu_custom_call.1} parent=1 // pred_check_branch
      %78 = sbr.rel (0) target = $region33
    $region32: #{tpu_custom_call.1} parent=1 // pred_region
      _
    $region33: #{tpu_custom_call.1} parent=1 // pred_fallthru
      _
    // Predicated region
    $region34: #{tpu_custom_call.1} parent=1 // pred_check
      _
    $region35: #{tpu_custom_call.1} parent=1 // pred_check_branch
      %80 = sbr.rel (0) target = $region37
    $region36: #{tpu_custom_call.1} parent=1 // pred_region
      %81 = dma.done [#allocation3], 128
    $region37: #{tpu_custom_call.1} parent=1 // pred_fallthru
      _
    // Predicated region
    $region38: #{tpu_custom_call.1} parent=1 // pred_check
      _
    $region39: #{tpu_custom_call.1} parent=1 // pred_check_branch
      %83 = sbr.rel (0) target = $region41
    $region40: #{tpu_custom_call.1} parent=1 // pred_region
      %84 = dma.done [#allocation6], 128
    $region41: #{tpu_custom_call.1} parent=1 // pred_fallthru
      _
    // Predicated region
    $region42: #{tpu_custom_call.1} parent=1 // pred_check
      _
    $region43: #{tpu_custom_call.1} parent=1 // pred_check_branch
      %86 = sbr.rel (0) target = $region45
    $region44: #{tpu_custom_call.1} parent=1 // pred_region
      %87 = dma.done [#allocation6], 256
    $region45: #{tpu_custom_call.1} parent=1 // pred_fallthru
      _
    // Predicated region
    $region46: #{tpu_custom_call.1} parent=1 // pred_check
      _
    $region47: #{tpu_custom_call.1} parent=1 // pred_check_branch
      %89 = sbr.rel (0) target = $region49
    $region48: #{tpu_custom_call.1} parent=1 // pred_region
      %90 = dma.done [#allocation9], 256
    $region49: #{tpu_custom_call.1} parent=1 // pred_fallthru
      _
    // Predicated region
    $region50: #{tpu_custom_call.1} parent=1 // pred_check
      _
    $region51: #{tpu_custom_call.1} parent=1 // pred_check_branch
      %92 = sbr.rel (0) target = $region53
    $region52: #{tpu_custom_call.1} parent=1 // pred_region
      %93 = dma.done [#allocation9], 512
    $region53: #{tpu_custom_call.1} parent=1 // pred_fallthru
      _
    %v94 = vld [vmem:[#allocation2] sm:$0xff]
    %v95 = vld [vmem:[#allocation5] sm:$0xff]
    %v96 = vld [vmem:[#allocation7] sm:$0xff]
    %v97 = vld [vmem:[#allocation7 + $0x8] sm:$0xff]
    %v98 = vld [vmem:[%s3] sm:$0x1]
    %v100 = vlaneseq
    %v101 = vshrl.u32 %v100, 7
    %v102 = vsub.s32 0, %v101
    %v103 = vrot.slane %v98, %v102
    %vm105 = vcmask 130048
    %v107 = vsel %vm105, %v94, 0
    %109 = vmatprep.subr.mxu0 0.0
    %110 = vmatpush1.msra.mxu0 %v96
    %111 = vmatprep.subr.mxu0 0.0
    %112 = vmatpush1.msra.mxu0 %v97
    %113 = vmatprep.subr.mxu0 0.0
    %114 = vmatpush1.msra.mxu0 0.0
    %115 = vmatprep.subr.mxu0 0.0
    %116 = vmatpush1.msra.mxu0 0.0
    %117 = vmatprep.subr.mxu0 0.0
    %118 = vmatpush1.msra.mxu0 0.0
    %119 = vmatprep.subr.mxu0 0.0
    %120 = vmatpush1.msra.mxu0 0.0
    %121 = vmatprep.subr.mxu0 0.0
    %122 = vmatpush1.msra.mxu0 0.0
    %123 = vmatprep.subr.mxu0 0.0
    %124 = vmatpush1.msra.mxu0 0.0
    %125 = vmatprep.subr.mxu0 0.0
    %126 = vmatpush1.msra.mxu0 0.0
    %127 = vmatprep.subr.mxu0 0.0
    %128 = vmatpush1.msra.mxu0 0.0
    %129 = vmatprep.subr.mxu0 0.0
    %130 = vmatpush1.msra.mxu0 0.0
    %131 = vmatprep.subr.mxu0 0.0
    %132 = vmatpush1.msra.mxu0 0.0
    %133 = vmatprep.subr.mxu0 0.0
    %134 = vmatpush1.msra.mxu0 0.0
    %135 = vmatprep.subr.mxu0 0.0
    %136 = vmatpush1.msra.mxu0 0.0
    %137 = vmatprep.subr.mxu0 0.0
    %138 = vmatpush1.msra.mxu0 0.0
    %139 = vmatprep.subr.mxu0 0.0
    %140 = vmatpush1.msra.mxu0 0.0
    %141 = vmatprep.subr.mxu0 0.0
    %142 = vmatpush1.msra.mxu0 0.0
    %143 = vmatprep.subr.mxu0 0.0
    %144 = vmatpush1.msra.mxu0 0.0
    %145 = vmatprep.subr.mxu0 0.0
    %146 = vmatpush1.msra.mxu0 0.0
    %147 = vmatprep.subr.mxu0 0.0
    %148 = vmatpush1.msra.mxu0 0.0
    %149 = vmatprep.subr.mxu0 0.0
    %150 = vmatpush1.msra.mxu0 0.0
    %151 = vmatprep.subr.mxu0 0.0
    %152 = vmatpush1.msra.mxu0 0.0
    %153 = vmatprep.subr.mxu0 0.0
    %154 = vmatpush1.msra.mxu0 0.0
    %155 = vmatprep.subr.mxu0 0.0
    %156 = vmatpush1.msra.mxu0 0.0
    %157 = vmatprep.subr.mxu0 0.0
    %158 = vmatpush1.msra.mxu0 0.0
    %159 = vmatprep.subr.mxu0 0.0
    %160 = vmatpush1.msra.mxu0 0.0
    %161 = vmatprep.subr.mxu0 0.0
    %162 = vmatpush1.msra.mxu0 0.0
    %163 = vmatprep.subr.mxu0 0.0
    %164 = vmatpush1.msra.mxu0 0.0
    %165 = vmatprep.subr.mxu0 0.0
    %166 = vmatpush1.msra.mxu0 0.0
    %167 = vmatprep.subr.mxu0 0.0
    %168 = vmatpush1.msra.mxu0 0.0
    %169 = vmatprep.subr.mxu0 0.0
    %170 = vmatpush1.msra.mxu0 0.0
    %171 = vmatprep.subr.mxu0 0.0
    %172 = vmatpush1.msra.mxu0 0.0
    %173 = vmatprep.mubr.f32.mxu0 0.0
    %174 = vmatmul.mubr.f32.gmra.mrb[0].mxu0 %v107
    %v175 = vpop.f32.mrb[0].mxu0
    %v176 = vadd.f32 %v103, %v175
    %v177 = vpop.f32.mrb[0].mxu0
    %178 = vdwg.mxu0
    %v179 = vld [vmem:[#allocation8] sm:$0xff]
    %v180 = vld [vmem:[#allocation8 + $0x8] sm:$0xff]
    %v181 = vld [vmem:[%s5] sm:$0x1]
    %v183 = vlaneseq
    %v184 = vshrl.u32 %v183, 7
    %v185 = vsub.s32 0, %v184
    %v186 = vrot.slane %v181, %v185
    %188 = vmatprep.subr.mxu0 0.0
    %189 = vmatpush1.msra.mxu0 %v179
    %190 = vmatprep.subr.mxu0 0.0
    %191 = vmatpush1.msra.mxu0 %v180
    %192 = vmatprep.subr.mxu0 0.0
    %193 = vmatpush1.msra.mxu0 0.0
    %194 = vmatprep.subr.mxu0 0.0
    %195 = vmatpush1.msra.mxu0 0.0
    %196 = vmatprep.subr.mxu0 0.0
    %197 = vmatpush1.msra.mxu0 0.0
    %198 = vmatprep.subr.mxu0 0.0
    %199 = vmatpush1.msra.mxu0 0.0
    %200 = vmatprep.subr.mxu0 0.0
    %201 = vmatpush1.msra.mxu0 0.0
    %202 = vmatprep.subr.mxu0 0.0
    %203 = vmatpush1.msra.mxu0 0.0
    %204 = vmatprep.subr.mxu0 0.0
    %205 = vmatpush1.msra.mxu0 0.0
    %206 = vmatprep.subr.mxu0 0.0
    %207 = vmatpush1.msra.mxu0 0.0
    %208 = vmatprep.subr.mxu0 0.0
    %209 = vmatpush1.msra.mxu0 0.0
    %210 = vmatprep.subr.mxu0 0.0
    %211 = vmatpush1.msra.mxu0 0.0
    %212 = vmatprep.subr.mxu0 0.0
    %213 = vmatpush1.msra.mxu0 0.0
    %214 = vmatprep.subr.mxu0 0.0
    %215 = vmatpush1.msra.mxu0 0.0
    %216 = vmatprep.subr.mxu0 0.0
    %217 = vmatpush1.msra.mxu0 0.0
    %218 = vmatprep.subr.mxu0 0.0
    %219 = vmatpush1.msra.mxu0 0.0
    %220 = vmatprep.subr.mxu0 0.0
    %221 = vmatpush1.msra.mxu0 0.0
    %222 = vmatprep.subr.mxu0 0.0
    %223 = vmatpush1.msra.mxu0 0.0
    %224 = vmatprep.subr.mxu0 0.0
    %225 = vmatpush1.msra.mxu0 0.0
    %226 = vmatprep.subr.mxu0 0.0
    %227 = vmatpush1.msra.mxu0 0.0
    %228 = vmatprep.subr.mxu0 0.0
    %229 = vmatpush1.msra.mxu0 0.0
    %230 = vmatprep.subr.mxu0 0.0
    %231 = vmatpush1.msra.mxu0 0.0
    %232 = vmatprep.subr.mxu0 0.0
    %233 = vmatpush1.msra.mxu0 0.0
    %234 = vmatprep.subr.mxu0 0.0
    %235 = vmatpush1.msra.mxu0 0.0
    %236 = vmatprep.subr.mxu0 0.0
    %237 = vmatpush1.msra.mxu0 0.0
    %238 = vmatprep.subr.mxu0 0.0
    %239 = vmatpush1.msra.mxu0 0.0
    %240 = vmatprep.subr.mxu0 0.0
    %241 = vmatpush1.msra.mxu0 0.0
    %242 = vmatprep.subr.mxu0 0.0
    %243 = vmatpush1.msra.mxu0 0.0
    %244 = vmatprep.subr.mxu0 0.0
    %245 = vmatpush1.msra.mxu0 0.0
    %246 = vmatprep.subr.mxu0 0.0
    %247 = vmatpush1.msra.mxu0 0.0
    %248 = vmatprep.subr.mxu0 0.0
    %249 = vmatpush1.msra.mxu0 0.0
    %250 = vmatprep.subr.mxu0 0.0
    %251 = vmatpush1.msra.mxu0 0.0
    %252 = vmatprep.mubr.f32.mxu0 0.0
    %253 = vmatmul.mubr.f32.gmra.mrb[0].mxu0 %v107
    %v254 = vpop.f32.mrb[0].mxu0
    %v255 = vadd.f32 %v186, %v254
    %v256 = vpop.f32.mrb[0].mxu0
    %257 = vdwg.mxu0
    %v258 = vld [vmem:[#allocation10] sm:$0xff]
    %v259 = vld [vmem:[#allocation10 + $0x8] sm:$0xff]
    %v260 = vld [vmem:[#allocation10 + $0x10] sm:$0xff]
    %v261 = vld [vmem:[#allocation10 + $0x18] sm:$0xff]
    %v262 = vld [vmem:[%s7] sm:$0x1]
    %v264 = vlaneseq
    %v265 = vshrl.u32 %v264, 7
    %v266 = vsub.s32 0, %v265
    %v267 = vrot.slane %v262, %v266
    %vm269 = vcmask 261120
    %v271 = vsel %vm269, %v95, 0
    %273 = vmatprep.subr.mxu0 0.0
    %274 = vmatpush1.msra.mxu0 %v258
    %275 = vmatprep.subr.mxu0 0.0
    %276 = vmatpush1.msra.mxu0 %v259
    %277 = vmatprep.subr.mxu0 0.0
    %278 = vmatpush1.msra.mxu0 %v260
    %279 = vmatprep.subr.mxu0 0.0
    %280 = vmatpush1.msra.mxu0 %v261
    %281 = vmatprep.subr.mxu0 0.0
    %282 = vmatpush1.msra.mxu0 0.0
    %283 = vmatprep.subr.mxu0 0.0
    %284 = vmatpush1.msra.mxu0 0.0
    %285 = vmatprep.subr.mxu0 0.0
    %286 = vmatpush1.msra.mxu0 0.0
    %287 = vmatprep.subr.mxu0 0.0
    %288 = vmatpush1.msra.mxu0 0.0
    %289 = vmatprep.subr.mxu0 0.0
    %290 = vmatpush1.msra.mxu0 0.0
    %291 = vmatprep.subr.mxu0 0.0
    %292 = vmatpush1.msra.mxu0 0.0
    %293 = vmatprep.subr.mxu0 0.0
    %294 = vmatpush1.msra.mxu0 0.0
    %295 = vmatprep.subr.mxu0 0.0
    %296 = vmatpush1.msra.mxu0 0.0
    %297 = vmatprep.subr.mxu0 0.0
    %298 = vmatpush1.msra.mxu0 0.0
    %299 = vmatprep.subr.mxu0 0.0
    %300 = vmatpush1.msra.mxu0 0.0
    %301 = vmatprep.subr.mxu0 0.0
    %302 = vmatpush1.msra.mxu0 0.0
    %303 = vmatprep.subr.mxu0 0.0
    %304 = vmatpush1.msra.mxu0 0.0
    %305 = vmatprep.subr.mxu0 0.0
    %306 = vmatpush1.msra.mxu0 0.0
    %307 = vmatprep.subr.mxu0 0.0
    %308 = vmatpush1.msra.mxu0 0.0
    %309 = vmatprep.subr.mxu0 0.0
    %310 = vmatpush1.msra.mxu0 0.0
    %311 = vmatprep.subr.mxu0 0.0
    %312 = vmatpush1.msra.mxu0 0.0
    %313 = vmatprep.subr.mxu0 0.0
    %314 = vmatpush1.msra.mxu0 0.0
    %315 = vmatprep.subr.mxu0 0.0
    %316 = vmatpush1.msra.mxu0 0.0
    %317 = vmatprep.subr.mxu0 0.0
    %318 = vmatpush1.msra.mxu0 0.0
    %319 = vmatprep.subr.mxu0 0.0
    %320 = vmatpush1.msra.mxu0 0.0
    %321 = vmatprep.subr.mxu0 0.0
    %322 = vmatpush1.msra.mxu0 0.0
    %323 = vmatprep.subr.mxu0 0.0
    %324 = vmatpush1.msra.mxu0 0.0
    %325 = vmatprep.subr.mxu0 0.0
    %326 = vmatpush1.msra.mxu0 0.0
    %327 = vmatprep.subr.mxu0 0.0
    %328 = vmatpush1.msra.mxu0 0.0
    %329 = vmatprep.subr.mxu0 0.0
    %330 = vmatpush1.msra.mxu0 0.0
    %331 = vmatprep.subr.mxu0 0.0
    %332 = vmatpush1.msra.mxu0 0.0
    %333 = vmatprep.subr.mxu0 0.0
    %334 = vmatpush1.msra.mxu0 0.0
    %335 = vmatprep.subr.mxu0 0.0
    %336 = vmatpush1.msra.mxu0 0.0
    %337 = vmatprep.mubr.f32.mxu0 0.0
    %338 = vmatmul.mubr.f32.gmra.mrb[0].mxu0 %v271
    %v339 = vpop.f32.mrb[0].mxu0
    %v340 = vadd.f32 %v267, %v339
    %v341 = vpop.f32.mrb[0].mxu0
    %342 = vdwg.mxu0
    %v343 = vadd.f32 %v255, %v340
    %v344 = vxor.u32 %v343, 2147483648
    %v345 = vmul.f32 %v344, 1.442695
    %v346 = vpow.pop %v345
    %v347 = vadd.f32 %v346, 1.0
    %v348 = vrcp.pop %v347
    %v349 = vmul.f32 1.0, %v348
    %v350 = vsub.f32 %v95, %v176
    %v351 = vmul.f32 %v349, %v350
    %v352 = vadd.f32 %v176, %v351
    %353 = vst.msk [vmem:[#allocation11] sm:$0xff] %vm269, %v352
    // Predicated region
    $region54: #{tpu_custom_call.1} parent=1 // pred_check
      _
    $region55: #{tpu_custom_call.1} parent=1 // pred_check_branch
      %355 = sbr.rel (0) target = $region57
    $region56: #{tpu_custom_call.1} parent=1 // pred_region
      %s357 = ssub.s32 128, 128
      %358 = vsyncadd [#allocation4], %s357
      %s360 = sshll.u32 [#allocation11], 4
      %s361 = int_to_ptr.vmem [resolvable:$true] %s360
      %363 = dma.vmem_to_hbm [thread:$0]  %s361, 128, %s8, [#allocation4]
    $region57: #{tpu_custom_call.1} parent=1 // pred_fallthru
      _
    // Predicated region
    $region58: #{tpu_custom_call.1} parent=1 // pred_check
      _
    $region59: #{tpu_custom_call.1} parent=1 // pred_check_branch
      %365 = sbr.rel (0) target = $region61
    $region60: #{tpu_custom_call.1} parent=1 // pred_region
      %366 = dma.done [#allocation4], 128
    $region61: #{tpu_custom_call.1} parent=1 // pred_fallthru
      _
    %367 = vsyncpa [#allocation3], 1
    %368 = vsyncpa [#allocation6], 1
    %369 = vsyncpa [#allocation9], 1
    %370 = vsyncpa [#allocation4], 1

</llo_original>
